<compile_context>
chip_gen: v5e
topology: v5e:2x2
jax: 0.10.0
libtpu: 0.0.40
codegen_flags: <defaults>
</compile_context>

<pallas_src>
import jax
import jax.numpy as jnp
from jax.experimental import pallas as pl
from jax.experimental.pallas import tpu as pltpu


LANE = 128  # TPU lane width; class dim padded to this for lane-dense stores
MIB = 1024 * 1024


def _round_up(n, m):
    return -(-n // m) * m


def _vmem_capacity_bytes():
    try:
        return int(pltpu.get_tpu_info().vmem_capacity_bytes)
    except Exception:
        return 64 * MIB  # conservative fallback (v7x per-TC VMEM)


# ---------------------------------------------------------------------------
# Kernel 1: SAGEConv1 (deferred-mean aggregation + lin_l/lin_r + bias) -> ReLU,
# then immediately applies the fused layer-2 weight [w2l | w2r] so layer 2's
# dominant NxN adjacency matmul runs over the (padded) class dim.
# Grid: (row blocks i "parallel", reduction blocks k "arbitrary").
# ---------------------------------------------------------------------------
def make_sage1_kernel(blk_k, x_resident):
    def sage1_kernel(a_ref, xk_ref, xi_ref, invdeg_ref, w1l_ref, w1r_ref,
                     b1_ref, w2_ref, p_ref, s_ref, acc_ref):
        k = pl.program_id(1)

        @pl.when(k == 0)
        def _():
            acc_ref[...] = jnp.zeros_like(acc_ref)

        # partial (unnormalized) aggregation: acc += A[i, k] @ x[k]
        a = a_ref[...].astype(jnp.bfloat16)
        if x_resident:
            start = pl.multiple_of(k * blk_k, blk_k)
            xk = xk_ref[pl.ds(start, blk_k), :]
        else:
            xk = xk_ref[...]
        acc_ref[...] += jnp.dot(a, xk, preferred_element_type=jnp.float32)

        @pl.when(k == pl.num_programs(1) - 1)
        def _():
            # deferred mean scaling, then SAGEConv1 + ReLU (bf16 MXU, f32 acc)
            mean_agg = (acc_ref[...] * invdeg_ref[...]).astype(jnp.bfloat16)
            h1 = (jnp.dot(mean_agg, w1l_ref[...],
                          preferred_element_type=jnp.float32)
                  + jnp.dot(xi_ref[...], w1r_ref[...],
                            preferred_element_type=jnp.float32)
                  + b1_ref[...])
            h1 = jnp.maximum(h1, 0.0).astype(jnp.bfloat16)
            # TODO(synk): F.dropout is identity at inference; training-mode
            # stochastic dropout is omitted.

            # Fused layer-2 lin_l/lin_r: one matmul h1 @ [w2l | w2r] -> [p | s].
            ps = jnp.dot(h1, w2_ref[...], preferred_element_type=jnp.float32)
            cp = p_ref.shape[1]
            p_ref[...] = ps[:, :cp].astype(p_ref.dtype)   # aggregated by A in pass 2
            s_ref[...] = ps[:, cp:].astype(s_ref.dtype)   # self term
    return sage1_kernel


# ---------------------------------------------------------------------------
# Kernel 2: layer-2 aggregation over the (padded) class dim + deferred 1/deg +
# bias + padding mask + log_softmax, lane-dense output store.
# ---------------------------------------------------------------------------
def make_sage2_kernel(blk_k, num_classes, p_resident):
    def sage2_kernel(a_ref, pk_ref, si_ref, invdeg_ref, b2_ref, out_ref,
                     acc_ref):
        k = pl.program_id(1)

        @pl.when(k == 0)
        def _():
            acc_ref[...] = jnp.zeros_like(acc_ref)

        a = a_ref[...].astype(jnp.bfloat16)
        if p_resident:
            start = pl.multiple_of(k * blk_k, blk_k)
            pk = pk_ref[pl.ds(start, blk_k), :]
        else:
            pk = pk_ref[...]
        acc_ref[...] += jnp.dot(a, pk, preferred_element_type=jnp.float32)

        @pl.when(k == pl.num_programs(1) - 1)
        def _():
            logits = (acc_ref[...] * invdeg_ref[...]
                      + si_ref[...].astype(jnp.float32) + b2_ref[...])
            # mask lane padding beyond the real class count before softmax
            col = jax.lax.broadcasted_iota(jnp.int32, logits.shape, 1)
            logits = jnp.where(col < num_classes, logits, -1e30)
            m = jnp.max(logits, axis=1, keepdims=True)
            z = logits - m
            lse = jnp.log(jnp.sum(jnp.exp(z), axis=1, keepdims=True))
            out_ref[...] = z - lse
    return sage2_kernel


def gnn_forward(x, edge_index, params):
    """x: (N, F) float32, edge_index: (2, E) int32 [src; dst]."""
    n, f = x.shape
    w1l, w1r, b1, w2l, w2r, b2 = params
    hidden = w1l.shape[1]
    num_classes = w2l.shape[1]

    # ---- tile sizes: blk_m (row, parallel) x blk_k (reduction, arbitrary) ----
    np0 = _round_up(max(n, LANE), LANE)
    blk_k = LANE
    while blk_k * 2 <= min(512, np0):
        blk_k *= 2
    # keep >= 4 row blocks when possible so the "parallel" axis can shard TCs
    row_cap = np0 // 4 if np0 >= 4 * LANE else np0
    blk_m = LANE
    while blk_m * 2 <= min(512, row_cap):
        blk_m *= 2
    np_ = _round_up(np0, max(blk_m, blk_k))   # divisible by both tiles
    cp = _round_up(num_classes, LANE)         # lane-dense class dim

    vmem_cap = _vmem_capacity_bytes()
    resident_budget = vmem_cap // 4

    src = edge_index[0]
    dst = edge_index[1]

    # Unnormalized 0/1 int8 adjacency (row = dst, col = src), O(E) scatter.
    # 1/deg mean normalization is deferred into the kernels (exact f32 scale,
    # no bf16-rounded 1/deg, no N^2 f32 passes in the wrapper).
    adj = jnp.zeros((np_, np_), jnp.int8).at[dst, src].add(
        jnp.ones_like(src, dtype=jnp.int8))
    deg = jnp.zeros((np_,), jnp.float32).at[dst].add(1.0)
    inv_deg = (1.0 / jnp.maximum(deg, 1.0)).reshape(np_, 1)

    # Single bf16 feature stream (also used for the self rows; f32 accumulate).
    x_bf = jnp.pad(x, ((0, np_ - n), (0, 0))).astype(jnp.bfloat16)

    # bf16 weights; fused, class-padded layer-2 weight [w2l | w2r] : (H, 2*cp)
    w1l_bf = w1l.astype(jnp.bfloat16)
    w1r_bf = w1r.astype(jnp.bfloat16)
    w2cat = jnp.concatenate(
        [jnp.pad(w2l, ((0, 0), (0, cp - num_classes))),
         jnp.pad(w2r, ((0, 0), (0, cp - num_classes)))],
        axis=1).astype(jnp.bfloat16)
    b2_pad = jnp.pad(b2, ((0, 0), (0, cp - num_classes)))

    # Residency decisions (count a possible double buffer conservatively).
    x_res = 2 * np_ * f * 2 <= resident_budget
    p_res = 2 * np_ * cp * 2 <= resident_budget

    grid = (np_ // blk_m, np_ // blk_k)
    dimsem = ("parallel", "arbitrary")

    # VMEM estimates (double-buffered inputs + acc + outputs) -> scoped limit.
    est1 = (2 * blk_m * blk_k                                   # A int8
            + (2 * np_ * f * 2 if x_res else 2 * blk_k * f * 2)  # xk
            + 2 * blk_m * f * 2                                  # xi
            + 2 * blk_m * 4                                      # 1/deg
            + 4 * f * hidden * 2 + 2 * hidden * 2 * cp * 2       # weights
            + 2 * hidden * 4                                     # b1
            + 4 * blk_m * cp * 2                                 # p, s outputs
            + blk_m * f * 4)                                     # acc scratch
    est2 = (2 * blk_m * blk_k
            + (2 * np_ * cp * 2 if p_res else 2 * blk_k * cp * 2)
            + 2 * blk_m * cp * 2
            + 2 * blk_m * 4 + 2 * cp * 4
            + 2 * blk_m * cp * 4
            + blk_m * cp * 4)

    def _vmem_limit(est):
        return int(min(vmem_cap - 2 * MIB,
                       max(32 * MIB, est * 5 // 4 + 2 * MIB)))

    # ---- pass 1: SAGEConv1 + ReLU + fused layer-2 weight matmul ----
    xk_spec = (pl.BlockSpec((np_, f), lambda i, k: (0, 0)) if x_res
               else pl.BlockSpec((blk_k, f), lambda i, k: (k, 0)))

    p, s = pl.pallas_call(
        make_sage1_kernel(blk_k, x_res),
        out_shape=(jax.ShapeDtypeStruct((np_, cp), jnp.bfloat16),
                   jax.ShapeDtypeStruct((np_, cp), jnp.bfloat16)),
        grid_spec=pltpu.PrefetchScalarGridSpec(
            num_scalar_prefetch=0,
            grid=grid,
            in_specs=[
                pl.BlockSpec((blk_m, blk_k), lambda i, k: (i, k)),   # A (int8)
                xk_spec,                                             # x bf16 (neighbor stream)
                pl.BlockSpec((blk_m, f), lambda i, k: (i, 0)),       # x bf16 (self rows)
                pl.BlockSpec((blk_m, 1), lambda i, k: (i, 0)),       # 1/deg f32
                pl.BlockSpec((f, hidden), lambda i, k: (0, 0)),      # w1l bf16
                pl.BlockSpec((f, hidden), lambda i, k: (0, 0)),      # w1r bf16
                pl.BlockSpec((1, hidden), lambda i, k: (0, 0)),      # b1 f32
                pl.BlockSpec((hidden, 2 * cp), lambda i, k: (0, 0)), # [w2l|w2r] bf16
            ],
            out_specs=[
                pl.BlockSpec((blk_m, cp), lambda i, k: (i, 0)),      # p = h1 @ w2l
                pl.BlockSpec((blk_m, cp), lambda i, k: (i, 0)),      # s = h1 @ w2r
            ],
            scratch_shapes=[pltpu.VMEM((blk_m, f), jnp.float32)],
        ),
        compiler_params=pltpu.CompilerParams(
            dimension_semantics=dimsem, vmem_limit_bytes=_vmem_limit(est1)),
    )(adj, x_bf, x_bf, inv_deg, w1l_bf, w1r_bf, b1, w2cat)

    # ---- pass 2: layer-2 aggregation over class dim + log_softmax ----
    pk_spec = (pl.BlockSpec((np_, cp), lambda i, k: (0, 0)) if p_res
               else pl.BlockSpec((blk_k, cp), lambda i, k: (k, 0)))

    out_pad = pl.pallas_call(
        make_sage2_kernel(blk_k, num_classes, p_res),
        out_shape=jax.ShapeDtypeStruct((np_, cp), jnp.float32),
        grid_spec=pltpu.PrefetchScalarGridSpec(
            num_scalar_prefetch=0,
            grid=grid,
            in_specs=[
                pl.BlockSpec((blk_m, blk_k), lambda i, k: (i, k)),   # A (int8)
                pk_spec,                                             # p bf16
                pl.BlockSpec((blk_m, cp), lambda i, k: (i, 0)),      # s bf16
                pl.BlockSpec((blk_m, 1), lambda i, k: (i, 0)),       # 1/deg f32
                pl.BlockSpec((1, cp), lambda i, k: (0, 0)),          # b2 (padded)
            ],
            out_specs=pl.BlockSpec((blk_m, cp), lambda i, k: (i, 0)),
            scratch_shapes=[pltpu.VMEM((blk_m, cp), jnp.float32)],
        ),
        compiler_params=pltpu.CompilerParams(
            dimension_semantics=dimsem, vmem_limit_bytes=_vmem_limit(est2)),
    )(adj, p, s, inv_deg, b2_pad)

    return out_pad[:n, :num_classes]


def init_params(key, num_features, hidden, num_classes):
    k1, k2, k3, k4 = jax.random.split(key, 4)

    def glorot(k, shape):
        lim = (6.0 / (shape[0] + shape[1])) ** 0.5
        return jax.random.uniform(k, shape, jnp.float32, -lim, lim)

    # Weights stored as (in, out); PyTorch Linear computes x @ W.T so this is
    # the transposed layout with identical math.
    return (glorot(k1, (num_features, hidden)),        # conv1.lin_l
            glorot(k2, (num_features, hidden)),        # conv1.lin_r
            jnp.zeros((1, hidden), jnp.float32),       # conv1 bias
            glorot(k3, (hidden, num_classes)),         # conv2.lin_l
            glorot(k4, (hidden, num_classes)),         # conv2.lin_r
            jnp.zeros((1, num_classes), jnp.float32))  # conv2 bias


if __name__ == "__main__":
    num_nodes, num_features, num_classes, hidden = 16, 16, 8, 32
    num_edges = 48

    key = jax.random.PRNGKey(0)
    kx, ke, kp = jax.random.split(key, 3)

    x = jax.random.normal(kx, (num_nodes, num_features), jnp.float32)
    edge_index = jax.random.randint(ke, (2, num_edges), 0, num_nodes,
                                    dtype=jnp.int32)
    params = init_params(kp, num_features, hidden, num_classes)

    out = gnn_forward(x, edge_index, params)
    jax.block_until_ready(out)
    assert out.shape == (num_nodes, num_classes)
    assert bool(jnp.all(jnp.isfinite(out)))
    print("KERNEL_OK")
</pallas_src>

<mosaic_0001>
module attributes {stable_mosaic.version = 11 : i64} {
  func.func @sage1_kernel(%arg0: i32, %arg1: i32, %arg2: memref<128x128xi8, #tpu.memory_space<vmem>>, %arg3: memref<128x16xbf16, #tpu.memory_space<vmem>>, %arg4: memref<128x16xbf16, #tpu.memory_space<vmem>>, %arg5: memref<128x1xf32, #tpu.memory_space<vmem>>, %arg6: memref<16x32xbf16, #tpu.memory_space<vmem>>, %arg7: memref<16x32xbf16, #tpu.memory_space<vmem>>, %arg8: memref<1x32xf32, #tpu.memory_space<vmem>>, %arg9: memref<32x256xbf16, #tpu.memory_space<vmem>>, %arg10: memref<128x128xbf16, #tpu.memory_space<vmem>>, %arg11: memref<128x128xbf16, #tpu.memory_space<vmem>>, %arg12: memref<128x16xf32, #tpu.memory_space<vmem>>) attributes {dimension_semantics = [#tpu.dimension_semantics<parallel>, #tpu.dimension_semantics<arbitrary>], iteration_bounds = array<i64: 1, 1>, scalar_prefetch = 0 : i64, scratch_operands = 1 : i64, tpu.core_type = #tpu.core_type<tc>, window_params = [{transform_indices = @transform_0, window_bounds = array<i64: 128, 128>}, {pipeline_mode = #tpu.pipeline_mode<synchronous>, transform_indices = @transform_1, window_bounds = array<i64: 128, 16>}, {transform_indices = @transform_2, window_bounds = array<i64: 128, 16>}, {transform_indices = @transform_3, window_bounds = array<i64: 128, 1>}, {pipeline_mode = #tpu.pipeline_mode<synchronous>, transform_indices = @transform_4, window_bounds = array<i64: 16, 32>}, {pipeline_mode = #tpu.pipeline_mode<synchronous>, transform_indices = @transform_5, window_bounds = array<i64: 16, 32>}, {pipeline_mode = #tpu.pipeline_mode<synchronous>, transform_indices = @transform_6, window_bounds = array<i64: 1, 32>}, {pipeline_mode = #tpu.pipeline_mode<synchronous>, transform_indices = @transform_7, window_bounds = array<i64: 32, 256>}, {transform_indices = @transform_8, window_bounds = array<i64: 128, 128>}, {transform_indices = @transform_9, window_bounds = array<i64: 128, 128>}]} {
    %c0_i32 = arith.constant 0 : i32
    %0 = arith.cmpi eq, %arg1, %c0_i32 : i32
    %1 = arith.extui %0 : i1 to i32
    %c0_i32_0 = arith.constant 0 : i32
    %2 = arith.cmpi ne, %1, %c0_i32_0 : i32
    scf.if %2 {
      %cst_9 = arith.constant 0.000000e+00 : f32
      %16 = vector.broadcast %cst_9 : f32 to vector<128x16xf32>
      %c0_10 = arith.constant 0 : index
      %c0_11 = arith.constant 0 : index
      %17 = vector.load %arg12[%c0_10, %c0_11] : memref<128x16xf32, #tpu.memory_space<vmem>>, vector<128x16xf32>
      tpu.vector_store %arg12[%c0_10, %c0_11], %16 {strides = array<i32>} : memref<128x16xf32, #tpu.memory_space<vmem>>, vector<128x16xf32>,
    } else {
    }
    %c0 = arith.constant 0 : index
    %c0_1 = arith.constant 0 : index
    %3 = vector.load %arg2[%c0, %c0_1] : memref<128x128xi8, #tpu.memory_space<vmem>>, vector<128x128xi8>
    %4 = arith.sitofp %3 : vector<128x128xi8> to vector<128x128xbf16>
    %c128_i32 = arith.constant 128 : i32
    %5 = arith.muli %arg1, %c128_i32 : i32
    %6 = tpu.assume_multiple %5, 128 : i32
    %7 = arith.index_cast %6 : i32 to index
    %c0_2 = arith.constant 0 : index
    %8 = vector.load %arg3[%7, %c0_2] : memref<128x16xbf16, #tpu.memory_space<vmem>>, vector<128x16xbf16>
    %c0_3 = arith.constant 0 : index
    %c0_4 = arith.constant 0 : index
    %9 = vector.load %arg12[%c0_3, %c0_4] : memref<128x16xf32, #tpu.memory_space<vmem>>, vector<128x16xf32>
    %cst = arith.constant dense<0.000000e+00> : vector<128x16xf32>
    %10 = tpu.matmul %4, %8, %cst {dimension_numbers = #tpu.dot_dimension_numbers<[1], [0], [0], [1], [0, 0, 1, 1], [], []>} : vector<128x128xbf16>, vector<128x16xbf16>, vector<128x16xf32> -> vector<128x16xf32>
    %11 = arith.addf %9, %10 : vector<128x16xf32>
    %c0_5 = arith.constant 0 : index
    %c0_6 = arith.constant 0 : index
    %12 = vector.load %arg12[%c0_5, %c0_6] : memref<128x16xf32, #tpu.memory_space<vmem>>, vector<128x16xf32>
    tpu.vector_store %arg12[%c0_5, %c0_6], %11 {strides = array<i32>} : memref<128x16xf32, #tpu.memory_space<vmem>>, vector<128x16xf32>,
    %c0_i32_7 = arith.constant 0 : i32
    %13 = arith.cmpi eq, %arg1, %c0_i32_7 : i32
    %14 = arith.extui %13 : i1 to i32
    %c0_i32_8 = arith.constant 0 : i32
    %15 = arith.cmpi ne, %14, %c0_i32_8 : i32
    scf.if %15 {
      %c0_9 = arith.constant 0 : index
      %c0_10 = arith.constant 0 : index
      %16 = vector.load %arg12[%c0_9, %c0_10] : memref<128x16xf32, #tpu.memory_space<vmem>>, vector<128x16xf32>
      %c0_11 = arith.constant 0 : index
      %c0_12 = arith.constant 0 : index
      %17 = vector.load %arg5[%c0_11, %c0_12] : memref<128x1xf32, #tpu.memory_space<vmem>>, vector<128x1xf32>
      %18 = vector.broadcast %17 : vector<128x1xf32> to vector<128x16xf32>
      %19 = arith.mulf %16, %18 : vector<128x16xf32>
      %20 = arith.truncf %19 : vector<128x16xf32> to vector<128x16xbf16>
      %c0_13 = arith.constant 0 : index
      %c0_14 = arith.constant 0 : index
      %21 = vector.load %arg6[%c0_13, %c0_14] : memref<16x32xbf16, #tpu.memory_space<vmem>>, vector<16x32xbf16>
      %cst_15 = arith.constant dense<0.000000e+00> : vector<128x32xf32>
      %22 = tpu.matmul %20, %21, %cst_15 {dimension_numbers = #tpu.dot_dimension_numbers<[1], [0], [0], [1], [0, 0, 1, 1], [], []>} : vector<128x16xbf16>, vector<16x32xbf16>, vector<128x32xf32> -> vector<128x32xf32>
      %c0_16 = arith.constant 0 : index
      %c0_17 = arith.constant 0 : index
      %23 = vector.load %arg4[%c0_16, %c0_17] : memref<128x16xbf16, #tpu.memory_space<vmem>>, vector<128x16xbf16>
      %c0_18 = arith.constant 0 : index
      %c0_19 = arith.constant 0 : index
      %24 = vector.load %arg7[%c0_18, %c0_19] : memref<16x32xbf16, #tpu.memory_space<vmem>>, vector<16x32xbf16>
      %cst_20 = arith.constant dense<0.000000e+00> : vector<128x32xf32>
      %25 = tpu.matmul %23, %24, %cst_20 {dimension_numbers = #tpu.dot_dimension_numbers<[1], [0], [0], [1], [0, 0, 1, 1], [], []>} : vector<128x16xbf16>, vector<16x32xbf16>, vector<128x32xf32> -> vector<128x32xf32>
      %26 = arith.addf %22, %25 : vector<128x32xf32>
      %c0_21 = arith.constant 0 : index
      %c0_22 = arith.constant 0 : index
      %27 = vector.load %arg8[%c0_21, %c0_22] : memref<1x32xf32, #tpu.memory_space<vmem>>, vector<1x32xf32>
      %28 = vector.broadcast %27 : vector<1x32xf32> to vector<128x32xf32>
      %29 = arith.addf %26, %28 : vector<128x32xf32>
      %cst_23 = arith.constant 0.000000e+00 : f32
      %30 = vector.broadcast %cst_23 : f32 to vector<128x32xf32>
      %31 = arith.maximumf %29, %30 : vector<128x32xf32>
      %32 = arith.truncf %31 : vector<128x32xf32> to vector<128x32xbf16>
      %c0_24 = arith.constant 0 : index
      %c0_25 = arith.constant 0 : index
      %33 = vector.load %arg9[%c0_24, %c0_25] : memref<32x256xbf16, #tpu.memory_space<vmem>>, vector<32x256xbf16>
      %cst_26 = arith.constant dense<0.000000e+00> : vector<128x256xf32>
      %34 = tpu.matmul %32, %33, %cst_26 {dimension_numbers = #tpu.dot_dimension_numbers<[1], [0], [0], [1], [0, 0, 1, 1], [], []>} : vector<128x32xbf16>, vector<32x256xbf16>, vector<128x256xf32> -> vector<128x256xf32>
      %35 = vector.extract_strided_slice %34 {offsets = [0, 0], sizes = [128, 128], strides = [1, 1]} : vector<128x256xf32> to vector<128x128xf32>
      %36 = arith.truncf %35 : vector<128x128xf32> to vector<128x128xbf16>
      %c0_27 = arith.constant 0 : index
      %c0_28 = arith.constant 0 : index
      %37 = vector.load %arg10[%c0_27, %c0_28] : memref<128x128xbf16, #tpu.memory_space<vmem>>, vector<128x128xbf16>
      tpu.vector_store %arg10[%c0_27, %c0_28], %36 {strides = array<i32>} : memref<128x128xbf16, #tpu.memory_space<vmem>>, vector<128x128xbf16>,
      %38 = vector.extract_strided_slice %34 {offsets = [0, 128], sizes = [128, 128], strides = [1, 1]} : vector<128x256xf32> to vector<128x128xf32>
      %39 = arith.truncf %38 : vector<128x128xf32> to vector<128x128xbf16>
      %c0_29 = arith.constant 0 : index
      %c0_30 = arith.constant 0 : index
      %40 = vector.load %arg11[%c0_29, %c0_30] : memref<128x128xbf16, #tpu.memory_space<vmem>>, vector<128x128xbf16>
      tpu.vector_store %arg11[%c0_29, %c0_30], %39 {strides = array<i32>} : memref<128x128xbf16, #tpu.memory_space<vmem>>, vector<128x128xbf16>,
    } else {
    }
    return
  }
  func.func @transform_0(%arg0: i32, %arg1: i32) -> (i32, i32) {
    %c0_i32 = arith.constant 0 : i32
    return %arg0, %arg1 : i32, i32
  }
  func.func @transform_1(%arg0: i32, %arg1: i32) -> (i32, i32) {
    %c0_i32 = arith.constant 0 : i32
    %c0_i32_0 = arith.constant 0 : i32
    %c0_i32_1 = arith.constant 0 : i32
    return %c0_i32, %c0_i32_0 : i32, i32
  }
  func.func @transform_2(%arg0: i32, %arg1: i32) -> (i32, i32) {
    %c0_i32 = arith.constant 0 : i32
    %c0_i32_0 = arith.constant 0 : i32
    return %arg0, %c0_i32 : i32, i32
  }
  func.func @transform_3(%arg0: i32, %arg1: i32) -> (i32, i32) {
    %c0_i32 = arith.constant 0 : i32
    %c0_i32_0 = arith.constant 0 : i32
    return %arg0, %c0_i32 : i32, i32
  }
  func.func @transform_4(%arg0: i32, %arg1: i32) -> (i32, i32) {
    %c0_i32 = arith.constant 0 : i32
    %c0_i32_0 = arith.constant 0 : i32
    %c0_i32_1 = arith.constant 0 : i32
    return %c0_i32, %c0_i32_0 : i32, i32
  }
  func.func @transform_5(%arg0: i32, %arg1: i32) -> (i32, i32) {
    %c0_i32 = arith.constant 0 : i32
    %c0_i32_0 = arith.constant 0 : i32
    %c0_i32_1 = arith.constant 0 : i32
    return %c0_i32, %c0_i32_0 : i32, i32
  }
  func.func @transform_6(%arg0: i32, %arg1: i32) -> (i32, i32) {
    %c0_i32 = arith.constant 0 : i32
    %c0_i32_0 = arith.constant 0 : i32
    %c0_i32_1 = arith.constant 0 : i32
    return %c0_i32, %c0_i32_0 : i32, i32
  }
  func.func @transform_7(%arg0: i32, %arg1: i32) -> (i32, i32) {
    %c0_i32 = arith.constant 0 : i32
    %c0_i32_0 = arith.constant 0 : i32
    %c0_i32_1 = arith.constant 0 : i32
    return %c0_i32, %c0_i32_0 : i32, i32
  }
  func.func @transform_8(%arg0: i32, %arg1: i32) -> (i32, i32) {
    %c0_i32 = arith.constant 0 : i32
    %c0_i32_0 = arith.constant 0 : i32
    return %arg0, %c0_i32 : i32, i32
  }
  func.func @transform_9(%arg0: i32, %arg1: i32) -> (i32, i32) {
    %c0_i32 = arith.constant 0 : i32
    %c0_i32_0 = arith.constant 0 : i32
    return %arg0, %c0_i32 : i32, i32
  }
}

</mosaic_0001>

<llo_original>
// kernel: tpu_custom_call.1
$region0: #{tpu_custom_call.1}
  #allocation0 [shape = 'u32[]', space=smem, size = 0x4, offset = 0x4, fixed_abs, tag = 'smem constant byte address 0x4 - core index']
  #allocation1 [shape = 'u32[72,128]{1,0:T(1,128)}', space=vmem, size = 0x9000, scoped, tag = 'internal scratch']
  #allocation2 [shape = 'f32[128,16]{1,0:T(8,128)}', space=vmem, size = 0x10000, scoped, tag = 'scratch operand']
  %s0 = inlined_call_operand.vmem [shape: s8[128,128], index: 0, kind: input, shape index: {}]
  %s1 = inlined_call_operand.vmem [shape: bf16[128,16], index: 1, kind: input, shape index: {}]
  %s2 = inlined_call_operand.vmem [shape: bf16[128,16], index: 2, kind: input, shape index: {}]
  %s3 = inlined_call_operand.vmem [shape: f32[128,1], index: 3, kind: input, shape index: {}]
  %s4 = inlined_call_operand.vmem [shape: bf16[16,32], index: 4, kind: input, shape index: {}]
  %s5 = inlined_call_operand.vmem [shape: bf16[16,32], index: 5, kind: input, shape index: {}]
  %s6 = inlined_call_operand.vmem [shape: f32[1,32], index: 6, kind: input, shape index: {}]
  %s7 = inlined_call_operand.vmem [shape: bf16[32,256], index: 7, kind: input, shape index: {}]
  %s8 = inlined_call_operand.hbm [shape: bf16[128,128], index: 8, kind: output, shape index: {0}]
  %s9 = inlined_call_operand.hbm [shape: bf16[128,128], index: 9, kind: output, shape index: {1}]
  %10 = xla_tuple %s8, %s9
  %s11 = sld [smem:[#allocation0]]
  $region58: #{tpu_custom_call.1} parent=0
    _
  %s13 = ssub.s32 1, %s11
  %s14 = scalar_select 0, %s13, %s11
  $region1: #{tpu_custom_call.1} parent=0
    #allocation3 [shape = 'u8[32768]{0}', space=vmem, size = 0x8000, scoped, tag = 'output window, operand 0, single buffered']
    #allocation4 [shape = 's32[1]{0}', space=sflag, size = 0x4, scoped, tag = 'scoped memory for tpu_custom_call.1']
    #allocation5 [shape = 'u8[32768]{0}', space=vmem, size = 0x8000, scoped, tag = 'output window, operand 1, single buffered']
    #allocation6 [shape = 's32[1]{0}', space=sflag, size = 0x4, scoped, tag = 'scoped memory for tpu_custom_call.1']
    %15 = vsyncpa [#allocation4], 0
    %16 = vsyncpa [#allocation6], 0
    // Predicated region
    $region2: #{tpu_custom_call.1} parent=1 // pred_check
      _
    $region3: #{tpu_custom_call.1} parent=1 // pred_check_branch
      %18 = sbr.rel (0) target = $region5
    $region4: #{tpu_custom_call.1} parent=1 // pred_region
      _
    $region5: #{tpu_custom_call.1} parent=1 // pred_fallthru
      _
    // Predicated region
    $region6: #{tpu_custom_call.1} parent=1 // pred_check
      _
    $region7: #{tpu_custom_call.1} parent=1 // pred_check_branch
      %20 = sbr.rel (0) target = $region9
    $region8: #{tpu_custom_call.1} parent=1 // pred_region
      _
    $region9: #{tpu_custom_call.1} parent=1 // pred_fallthru
      _
    // Predicated region
    $region10: #{tpu_custom_call.1} parent=1 // pred_check
      _
    $region11: #{tpu_custom_call.1} parent=1 // pred_check_branch
      %22 = sbr.rel (0) target = $region13
    $region12: #{tpu_custom_call.1} parent=1 // pred_region
      _
    $region13: #{tpu_custom_call.1} parent=1 // pred_fallthru
      _
    // Predicated region
    $region14: #{tpu_custom_call.1} parent=1 // pred_check
      _
    $region15: #{tpu_custom_call.1} parent=1 // pred_check_branch
      %24 = sbr.rel (0) target = $region17
    $region16: #{tpu_custom_call.1} parent=1 // pred_region
      _
    $region17: #{tpu_custom_call.1} parent=1 // pred_fallthru
      _
    // Predicated region
    $region18: #{tpu_custom_call.1} parent=1 // pred_check
      _
    $region19: #{tpu_custom_call.1} parent=1 // pred_check_branch
      %26 = sbr.rel (0) target = $region21
    $region20: #{tpu_custom_call.1} parent=1 // pred_region
      _
    $region21: #{tpu_custom_call.1} parent=1 // pred_fallthru
      _
    // Predicated region
    $region22: #{tpu_custom_call.1} parent=1 // pred_check
      _
    $region23: #{tpu_custom_call.1} parent=1 // pred_check_branch
      %28 = sbr.rel (0) target = $region25
    $region24: #{tpu_custom_call.1} parent=1 // pred_region
      _
    $region25: #{tpu_custom_call.1} parent=1 // pred_fallthru
      _
    // Predicated region
    $region26: #{tpu_custom_call.1} parent=1 // pred_check
      _
    $region27: #{tpu_custom_call.1} parent=1 // pred_check_branch
      %30 = sbr.rel (0) target = $region29
    $region28: #{tpu_custom_call.1} parent=1 // pred_region
      _
    $region29: #{tpu_custom_call.1} parent=1 // pred_fallthru
      _
    // Predicated region
    $region30: #{tpu_custom_call.1} parent=1 // pred_check
      _
    $region31: #{tpu_custom_call.1} parent=1 // pred_check_branch
      %32 = sbr.rel (0) target = $region33
    $region32: #{tpu_custom_call.1} parent=1 // pred_region
      _
    $region33: #{tpu_custom_call.1} parent=1 // pred_fallthru
      _
    %p34 = scmp.eq.s32.totalorder 0, 0
    // Predicated region
    $region34: #{tpu_custom_call.1} parent=1 // pred_check
      %p35 = pneg %p34
    $region35: #{tpu_custom_call.1} parent=1 // pred_check_branch
      %37 = sbr.rel (%p35) target = $region37
    $region36: #{tpu_custom_call.1} parent=1 // pred_region
      %vm38 = vcmask 130048
      %39 = vst.msk [vmem:[#allocation2] sm:$0xff] %vm38, 0.0
      %40 = vst.msk [vmem:[#allocation2 + $0x8] sm:$0xff] %vm38, 0.0
      %41 = vst.msk [vmem:[#allocation2 + $0x10] sm:$0xff] %vm38, 0.0
      %42 = vst.msk [vmem:[#allocation2 + $0x18] sm:$0xff] %vm38, 0.0
      %43 = vst.msk [vmem:[#allocation2 + $0x20] sm:$0xff] %vm38, 0.0
      %44 = vst.msk [vmem:[#allocation2 + $0x28] sm:$0xff] %vm38, 0.0
      %45 = vst.msk [vmem:[#allocation2 + $0x30] sm:$0xff] %vm38, 0.0
      %46 = vst.msk [vmem:[#allocation2 + $0x38] sm:$0xff] %vm38, 0.0
      %47 = vst.msk [vmem:[#allocation2 + $0x40] sm:$0xff] %vm38, 0.0
      %48 = vst.msk [vmem:[#allocation2 + $0x48] sm:$0xff] %vm38, 0.0
      %49 = vst.msk [vmem:[#allocation2 + $0x50] sm:$0xff] %vm38, 0.0
      %50 = vst.msk [vmem:[#allocation2 + $0x58] sm:$0xff] %vm38, 0.0
      %51 = vst.msk [vmem:[#allocation2 + $0x60] sm:$0xff] %vm38, 0.0
      %52 = vst.msk [vmem:[#allocation2 + $0x68] sm:$0xff] %vm38, 0.0
      %53 = vst.msk [vmem:[#allocation2 + $0x70] sm:$0xff] %vm38, 0.0
      %54 = vst.msk [vmem:[#allocation2 + $0x78] sm:$0xff] %vm38, 0.0
    $region37: #{tpu_custom_call.1} parent=1 // pred_fallthru
      _
    %v55 = vld [vmem:[%s0] sm:$0xff]
    %v56 = vld [vmem:[%s0 + $0x8] sm:$0xff]
    %v57 = vld [vmem:[%s0 + $0x10] sm:$0xff]
    %v58 = vld [vmem:[%s0 + $0x18] sm:$0xff]
    %v59 = vunpack.c.0.s8 %v55
    %v60 = vunpack.c.1.s8 %v55
    %v61 = vunpack.c.2.s8 %v55
    %v62 = vunpack.c.3.s8 %v55
    %v63 = vunpack.c.0.s8 %v56
    %v64 = vunpack.c.1.s8 %v56
    %v65 = vunpack.c.2.s8 %v56
    %v66 = vunpack.c.3.s8 %v56
    %v67 = vunpack.c.0.s8 %v57
    %v68 = vunpack.c.1.s8 %v57
    %v69 = vunpack.c.2.s8 %v57
    %v70 = vunpack.c.3.s8 %v57
    %v71 = vunpack.c.0.s8 %v58
    %v72 = vunpack.c.1.s8 %v58
    %v73 = vunpack.c.2.s8 %v58
    %v74 = vunpack.c.3.s8 %v58
    %v75 = vcvt.s32.f32 %v59
    %v76 = vcvt.s32.f32 %v60
    %v77 = vcvt.s32.f32 %v61
    %v78 = vcvt.s32.f32 %v62
    %v79 = vcvt.s32.f32 %v63
    %v80 = vcvt.s32.f32 %v64
    %v81 = vcvt.s32.f32 %v65
    %v82 = vcvt.s32.f32 %v66
    %v83 = vcvt.s32.f32 %v67
    %v84 = vcvt.s32.f32 %v68
    %v85 = vcvt.s32.f32 %v69
    %v86 = vcvt.s32.f32 %v70
    %v87 = vcvt.s32.f32 %v71
    %v88 = vcvt.s32.f32 %v72
    %v89 = vcvt.s32.f32 %v73
    %v90 = vcvt.s32.f32 %v74
    %v91 = vpack.c.bf16 %v76, %v75
    %v92 = vpack.c.bf16 %v78, %v77
    %v93 = vpack.c.bf16 %v80, %v79
    %v94 = vpack.c.bf16 %v82, %v81
    %v95 = vpack.c.bf16 %v84, %v83
    %v96 = vpack.c.bf16 %v86, %v85
    %v97 = vpack.c.bf16 %v88, %v87
    %v98 = vpack.c.bf16 %v90, %v89
    %s99 = smul.u32 0, 128
    %s100 = sshra.s32 %s99, 3
    %s101 = sand.u32 %s99, 7
    %s102 = smul.addr %s100, 4
    %s103 = scalar_lea.vmem %s1, %s102
    %v104 = vld [vmem:[%s103] sm:$0xf]
    %v105 = vld [vmem:[%s103 + $0x4] sm:$0xf]
    %v106 = vld [vmem:[%s103 + $0x8] sm:$0xf]
    %v107 = vld [vmem:[%s103 + $0xc] sm:$0xf]
    %v108 = vld [vmem:[%s103 + $0x10] sm:$0xf]
    %v109 = vld [vmem:[%s103 + $0x14] sm:$0xf]
    %v110 = vld [vmem:[%s103 + $0x18] sm:$0xf]
    %v111 = vld [vmem:[%s103 + $0x1c] sm:$0xf]
    %v112 = vld [vmem:[%s103 + $0x20] sm:$0xf]
    %v113 = vld [vmem:[%s103 + $0x24] sm:$0xf]
    %v114 = vld [vmem:[%s103 + $0x28] sm:$0xf]
    %v115 = vld [vmem:[%s103 + $0x2c] sm:$0xf]
    %v116 = vld [vmem:[%s103 + $0x30] sm:$0xf]
    %v117 = vld [vmem:[%s103 + $0x34] sm:$0xf]
    %v118 = vld [vmem:[%s103 + $0x38] sm:$0xf]
    %v119 = vld [vmem:[%s103 + $0x3c] sm:$0xf]
    %v120 = vld [vmem:[#allocation2] sm:$0xff]
    %v121 = vld [vmem:[#allocation2 + $0x8] sm:$0xff]
    %v122 = vld [vmem:[#allocation2 + $0x10] sm:$0xff]
    %v123 = vld [vmem:[#allocation2 + $0x18] sm:$0xff]
    %v124 = vld [vmem:[#allocation2 + $0x20] sm:$0xff]
    %v125 = vld [vmem:[#allocation2 + $0x28] sm:$0xff]
    %v126 = vld [vmem:[#allocation2 + $0x30] sm:$0xff]
    %v127 = vld [vmem:[#allocation2 + $0x38] sm:$0xff]
    %v128 = vld [vmem:[#allocation2 + $0x40] sm:$0xff]
    %v129 = vld [vmem:[#allocation2 + $0x48] sm:$0xff]
    %v130 = vld [vmem:[#allocation2 + $0x50] sm:$0xff]
    %v131 = vld [vmem:[#allocation2 + $0x58] sm:$0xff]
    %v132 = vld [vmem:[#allocation2 + $0x60] sm:$0xff]
    %v133 = vld [vmem:[#allocation2 + $0x68] sm:$0xff]
    %v134 = vld [vmem:[#allocation2 + $0x70] sm:$0xff]
    %v135 = vld [vmem:[#allocation2 + $0x78] sm:$0xff]
    %v152 = vunpack.c.l.b16 %v104
    %v153 = vunpack.c.l.b16 %v105
    %v154 = vunpack.c.l.b16 %v106
    %v155 = vunpack.c.l.b16 %v107
    %v156 = vunpack.c.l.b16 %v108
    %v157 = vunpack.c.l.b16 %v109
    %v158 = vunpack.c.l.b16 %v110
    %v159 = vunpack.c.l.b16 %v111
    %v160 = vunpack.c.l.b16 %v112
    %v161 = vunpack.c.l.b16 %v113
    %v162 = vunpack.c.l.b16 %v114
    %v163 = vunpack.c.l.b16 %v115
    %v164 = vunpack.c.l.b16 %v116
    %v165 = vunpack.c.l.b16 %v117
    %v166 = vunpack.c.l.b16 %v118
    %v167 = vunpack.c.l.b16 %v119
    %v168 = vpack.c.b16 %v153, %v152
    %v169 = vpack.c.b16 %v155, %v154
    %v170 = vpack.c.b16 %v157, %v156
    %v171 = vpack.c.b16 %v159, %v158
    %v172 = vpack.c.b16 %v161, %v160
    %v173 = vpack.c.b16 %v163, %v162
    %v174 = vpack.c.b16 %v165, %v164
    %v175 = vpack.c.b16 %v167, %v166
    %184 = vmatpush.bf16.msra.mxu0 %v175
    %185 = vmatpush.bf16.msra.mxu0 %v174
    %186 = vmatpush.bf16.msra.mxu0 %v173
    %187 = vmatpush.bf16.msra.mxu0 %v172
    %188 = vmatpush.bf16.msra.mxu0 %v171
    %189 = vmatpush.bf16.msra.mxu0 %v170
    %190 = vmatpush.bf16.msra.mxu0 %v169
    %191 = vmatpush.bf16.msra.mxu0 %v168
    %192 = vmatmul.bf16.gmra.mxu0 %v91
    %v193 = vpop.f32.mrf.mxu0
    %v194 = vadd.f32 0.0, %v193
    %v195 = vpop.f32.mrf.mxu0
    %v196 = vadd.f32 0.0, %v195
    %197 = vmatmul.bf16.gmra.mxu0 %v92
    %v198 = vpop.f32.mrf.mxu0
    %v199 = vadd.f32 0.0, %v198
    %v200 = vpop.f32.mrf.mxu0
    %v201 = vadd.f32 0.0, %v200
    %202 = vmatmul.bf16.gmra.mxu0 %v93
    %v203 = vpop.f32.mrf.mxu0
    %v204 = vadd.f32 0.0, %v203
    %v205 = vpop.f32.mrf.mxu0
    %v206 = vadd.f32 0.0, %v205
    %207 = vmatmul.bf16.gmra.mxu0 %v94
    %v208 = vpop.f32.mrf.mxu0
    %v209 = vadd.f32 0.0, %v208
    %v210 = vpop.f32.mrf.mxu0
    %v211 = vadd.f32 0.0, %v210
    %212 = vmatmul.bf16.gmra.mxu0 %v95
    %v213 = vpop.f32.mrf.mxu0
    %v214 = vadd.f32 0.0, %v213
    %v215 = vpop.f32.mrf.mxu0
    %v216 = vadd.f32 0.0, %v215
    %217 = vmatmul.bf16.gmra.mxu0 %v96
    %v218 = vpop.f32.mrf.mxu0
    %v219 = vadd.f32 0.0, %v218
    %v220 = vpop.f32.mrf.mxu0
    %v221 = vadd.f32 0.0, %v220
    %222 = vmatmul.bf16.gmra.mxu0 %v97
    %v223 = vpop.f32.mrf.mxu0
    %v224 = vadd.f32 0.0, %v223
    %v225 = vpop.f32.mrf.mxu0
    %v226 = vadd.f32 0.0, %v225
    %227 = vmatmul.bf16.gmra.mxu0 %v98
    %v228 = vpop.f32.mrf.mxu0
    %v229 = vadd.f32 0.0, %v228
    %v230 = vpop.f32.mrf.mxu0
    %v231 = vadd.f32 0.0, %v230
    %232 = vdwg.mxu0
    %v233 = vadd.f32 %v120, %v194
    %v234 = vadd.f32 %v121, %v196
    %v235 = vadd.f32 %v122, %v199
    %v236 = vadd.f32 %v123, %v201
    %v237 = vadd.f32 %v124, %v204
    %v238 = vadd.f32 %v125, %v206
    %v239 = vadd.f32 %v126, %v209
    %v240 = vadd.f32 %v127, %v211
    %v241 = vadd.f32 %v128, %v214
    %v242 = vadd.f32 %v129, %v216
    %v243 = vadd.f32 %v130, %v219
    %v244 = vadd.f32 %v131, %v221
    %v245 = vadd.f32 %v132, %v224
    %v246 = vadd.f32 %v133, %v226
    %v247 = vadd.f32 %v134, %v229
    %v248 = vadd.f32 %v135, %v231
    %vm249 = vcmask 130048
    %250 = vst.msk [vmem:[#allocation2] sm:$0xff] %vm249, %v233
    %251 = vst.msk [vmem:[#allocation2 + $0x8] sm:$0xff] %vm249, %v234
    %252 = vst.msk [vmem:[#allocation2 + $0x10] sm:$0xff] %vm249, %v235
    %253 = vst.msk [vmem:[#allocation2 + $0x18] sm:$0xff] %vm249, %v236
    %254 = vst.msk [vmem:[#allocation2 + $0x20] sm:$0xff] %vm249, %v237
    %255 = vst.msk [vmem:[#allocation2 + $0x28] sm:$0xff] %vm249, %v238
    %256 = vst.msk [vmem:[#allocation2 + $0x30] sm:$0xff] %vm249, %v239
    %257 = vst.msk [vmem:[#allocation2 + $0x38] sm:$0xff] %vm249, %v240
    %258 = vst.msk [vmem:[#allocation2 + $0x40] sm:$0xff] %vm249, %v241
    %259 = vst.msk [vmem:[#allocation2 + $0x48] sm:$0xff] %vm249, %v242
    %260 = vst.msk [vmem:[#allocation2 + $0x50] sm:$0xff] %vm249, %v243
    %261 = vst.msk [vmem:[#allocation2 + $0x58] sm:$0xff] %vm249, %v244
    %262 = vst.msk [vmem:[#allocation2 + $0x60] sm:$0xff] %vm249, %v245
    %263 = vst.msk [vmem:[#allocation2 + $0x68] sm:$0xff] %vm249, %v246
    %264 = vst.msk [vmem:[#allocation2 + $0x70] sm:$0xff] %vm249, %v247
    %265 = vst.msk [vmem:[#allocation2 + $0x78] sm:$0xff] %vm249, %v248
    // Predicated region
    $region38: #{tpu_custom_call.1} parent=1 // pred_check
      %p266 = pneg %p34
    $region39: #{tpu_custom_call.1} parent=1 // pred_check_branch
      %268 = sbr.rel (%p266) target = $region41
    $region40: #{tpu_custom_call.1} parent=1 // pred_region
      %v269 = vld [vmem:[#allocation2] sm:$0xff]
      %v270 = vld [vmem:[#allocation2 + $0x8] sm:$0xff]
      %v271 = vld [vmem:[#allocation2 + $0x10] sm:$0xff]
      %v272 = vld [vmem:[#allocation2 + $0x18] sm:$0xff]
      %v273 = vld [vmem:[#allocation2 + $0x20] sm:$0xff]
      %v274 = vld [vmem:[#allocation2 + $0x28] sm:$0xff]
      %v275 = vld [vmem:[#allocation2 + $0x30] sm:$0xff]
      %v276 = vld [vmem:[#allocation2 + $0x38] sm:$0xff]
      %v277 = vld [vmem:[#allocation2 + $0x40] sm:$0xff]
      %v278 = vld [vmem:[#allocation2 + $0x48] sm:$0xff]
      %v279 = vld [vmem:[#allocation2 + $0x50] sm:$0xff]
      %v280 = vld [vmem:[#allocation2 + $0x58] sm:$0xff]
      %v281 = vld [vmem:[#allocation2 + $0x60] sm:$0xff]
      %v282 = vld [vmem:[#allocation2 + $0x68] sm:$0xff]
      %v283 = vld [vmem:[#allocation2 + $0x70] sm:$0xff]
      %v284 = vld [vmem:[#allocation2 + $0x78] sm:$0xff]
      %v285 = vld [vmem:[%s3] sm:$0xff]
      %v286 = vld [vmem:[%s3 + $0x8] sm:$0xff]
      %v287 = vld [vmem:[%s3 + $0x10] sm:$0xff]
      %v288 = vld [vmem:[%s3 + $0x18] sm:$0xff]
      %v289 = vld [vmem:[%s3 + $0x20] sm:$0xff]
      %v290 = vld [vmem:[%s3 + $0x28] sm:$0xff]
      %v291 = vld [vmem:[%s3 + $0x30] sm:$0xff]
      %v292 = vld [vmem:[%s3 + $0x38] sm:$0xff]
      %v293 = vld [vmem:[%s3 + $0x40] sm:$0xff]
      %v294 = vld [vmem:[%s3 + $0x48] sm:$0xff]
      %v295 = vld [vmem:[%s3 + $0x50] sm:$0xff]
      %v296 = vld [vmem:[%s3 + $0x58] sm:$0xff]
      %v297 = vld [vmem:[%s3 + $0x60] sm:$0xff]
      %v298 = vld [vmem:[%s3 + $0x68] sm:$0xff]
      %v299 = vld [vmem:[%s3 + $0x70] sm:$0xff]
      %v300 = vld [vmem:[%s3 + $0x78] sm:$0xff]
      %302 = vset.pattern.permute.xlu0 0
      %303 = vperm.xlu0 %302, %v285
      %v304 = vpop.permute.xlu0 %303
      %307 = vset.pattern.permute.xlu0 0
      %308 = vperm.xlu0 %307, %v286
      %v309 = vpop.permute.xlu0 %308
      %312 = vset.pattern.permute.xlu0 0
      %313 = vperm.xlu0 %312, %v287
      %v314 = vpop.permute.xlu0 %313
      %317 = vset.pattern.permute.xlu0 0
      %318 = vperm.xlu0 %317, %v288
      %v319 = vpop.permute.xlu0 %318
      %322 = vset.pattern.permute.xlu0 0
      %323 = vperm.xlu0 %322, %v289
      %v324 = vpop.permute.xlu0 %323
      %327 = vset.pattern.permute.xlu0 0
      %328 = vperm.xlu0 %327, %v290
      %v329 = vpop.permute.xlu0 %328
      %332 = vset.pattern.permute.xlu0 0
      %333 = vperm.xlu0 %332, %v291
      %v334 = vpop.permute.xlu0 %333
      %337 = vset.pattern.permute.xlu0 0
      %338 = vperm.xlu0 %337, %v292
      %v339 = vpop.permute.xlu0 %338
      %342 = vset.pattern.permute.xlu0 0
      %343 = vperm.xlu0 %342, %v293
      %v344 = vpop.permute.xlu0 %343
      %347 = vset.pattern.permute.xlu0 0
      %348 = vperm.xlu0 %347, %v294
      %v349 = vpop.permute.xlu0 %348
      %352 = vset.pattern.permute.xlu0 0
      %353 = vperm.xlu0 %352, %v295
      %v354 = vpop.permute.xlu0 %353
      %357 = vset.pattern.permute.xlu0 0
      %358 = vperm.xlu0 %357, %v296
      %v359 = vpop.permute.xlu0 %358
      %362 = vset.pattern.permute.xlu0 0
      %363 = vperm.xlu0 %362, %v297
      %v364 = vpop.permute.xlu0 %363
      %367 = vset.pattern.permute.xlu0 0
      %368 = vperm.xlu0 %367, %v298
      %v369 = vpop.permute.xlu0 %368
      %372 = vset.pattern.permute.xlu0 0
      %373 = vperm.xlu0 %372, %v299
      %v374 = vpop.permute.xlu0 %373
      %377 = vset.pattern.permute.xlu0 0
      %378 = vperm.xlu0 %377, %v300
      %v379 = vpop.permute.xlu0 %378
      %v381 = vmul.f32 %v269, %v304
      %v382 = vmul.f32 %v270, %v309
      %v383 = vmul.f32 %v271, %v314
      %v384 = vmul.f32 %v272, %v319
      %v385 = vmul.f32 %v273, %v324
      %v386 = vmul.f32 %v274, %v329
      %v387 = vmul.f32 %v275, %v334
      %v388 = vmul.f32 %v276, %v339
      %v389 = vmul.f32 %v277, %v344
      %v390 = vmul.f32 %v278, %v349
      %v391 = vmul.f32 %v279, %v354
      %v392 = vmul.f32 %v280, %v359
      %v393 = vmul.f32 %v281, %v364
      %v394 = vmul.f32 %v282, %v369
      %v395 = vmul.f32 %v283, %v374
      %v396 = vmul.f32 %v284, %v379
      %v397 = vpack.c.bf16 %v382, %v381
      %v398 = vpack.c.bf16 %v384, %v383
      %v399 = vpack.c.bf16 %v386, %v385
      %v400 = vpack.c.bf16 %v388, %v387
      %v401 = vpack.c.bf16 %v390, %v389
      %v402 = vpack.c.bf16 %v392, %v391
      %v403 = vpack.c.bf16 %v394, %v393
      %v404 = vpack.c.bf16 %v396, %v395
      %v405 = vld [vmem:[%s4] sm:$0xf]
      %v406 = vld [vmem:[%s4 + $0x4] sm:$0xf]
      %v407 = vld [vmem:[%s2] sm:$0xf]
      %v408 = vld [vmem:[%s2 + $0x4] sm:$0xf]
      %v409 = vld [vmem:[%s2 + $0x8] sm:$0xf]
      %v410 = vld [vmem:[%s2 + $0xc] sm:$0xf]
      %v411 = vld [vmem:[%s2 + $0x10] sm:$0xf]
      %v412 = vld [vmem:[%s2 + $0x14] sm:$0xf]
      %v413 = vld [vmem:[%s2 + $0x18] sm:$0xf]
      %v414 = vld [vmem:[%s2 + $0x1c] sm:$0xf]
      %v415 = vld [vmem:[%s2 + $0x20] sm:$0xf]
      %v416 = vld [vmem:[%s2 + $0x24] sm:$0xf]
      %v417 = vld [vmem:[%s2 + $0x28] sm:$0xf]
      %v418 = vld [vmem:[%s2 + $0x2c] sm:$0xf]
      %v419 = vld [vmem:[%s2 + $0x30] sm:$0xf]
      %v420 = vld [vmem:[%s2 + $0x34] sm:$0xf]
      %v421 = vld [vmem:[%s2 + $0x38] sm:$0xf]
      %v422 = vld [vmem:[%s2 + $0x3c] sm:$0xf]
      %v423 = vld [vmem:[%s5] sm:$0xf]
      %v424 = vld [vmem:[%s5 + $0x4] sm:$0xf]
      %v441 = vunpack.c.l.b16 %v407
      %v442 = vunpack.c.l.b16 %v408
      %v443 = vunpack.c.l.b16 %v409
      %v444 = vunpack.c.l.b16 %v410
      %v445 = vunpack.c.l.b16 %v411
      %v446 = vunpack.c.l.b16 %v412
      %v447 = vunpack.c.l.b16 %v413
      %v448 = vunpack.c.l.b16 %v414
      %v449 = vunpack.c.l.b16 %v415
      %v450 = vunpack.c.l.b16 %v416
      %v451 = vunpack.c.l.b16 %v417
      %v452 = vunpack.c.l.b16 %v418
      %v453 = vunpack.c.l.b16 %v419
      %v454 = vunpack.c.l.b16 %v420
      %v455 = vunpack.c.l.b16 %v421
      %v456 = vunpack.c.l.b16 %v422
      %v457 = vpack.c.b16 %v442, %v441
      %v458 = vpack.c.b16 %v444, %v443
      %v459 = vpack.c.b16 %v446, %v445
      %v460 = vpack.c.b16 %v448, %v447
      %v461 = vpack.c.b16 %v450, %v449
      %v462 = vpack.c.b16 %v452, %v451
      %v463 = vpack.c.b16 %v454, %v453
      %v464 = vpack.c.b16 %v456, %v455
      %v467 = vunpack.c.l.b16 %v423
      %v468 = vunpack.c.l.b16 %v424
      %v469 = vpack.c.b16 %v468, %v467
      %v472 = vsel %vm249, %v457, 0
      %v475 = vsel %vm249, %v458, 0
      %v478 = vsel %vm249, %v459, 0
      %v481 = vsel %vm249, %v460, 0
      %v484 = vsel %vm249, %v461, 0
      %v487 = vsel %vm249, %v462, 0
      %v490 = vsel %vm249, %v463, 0
      %v493 = vsel %vm249, %v464, 0
      %495 = vmatpush.bf16.msra.mxu0 0
      %496 = vmatpush.bf16.msra.mxu0 0
      %497 = vmatpush.bf16.msra.mxu0 0
      %498 = vmatpush.bf16.msra.mxu0 0
      %499 = vmatpush.bf16.msra.mxu0 0
      %500 = vmatpush.bf16.msra.mxu0 0
      %501 = vmatpush.bf16.msra.mxu0 0
      %502 = vmatpush.bf16.msra.mxu0 %v469
      %503 = vmatmul.bf16.gmra.mxu0 %v472
      %v504 = vpop.f32.mrf.mxu0
      %v505 = vadd.f32 0.0, %v504
      %v506 = vpop.f32.mrf.mxu0
      %v507 = vadd.f32 0.0, %v506
      %508 = vmatmul.bf16.gmra.mxu0 %v475
      %v509 = vpop.f32.mrf.mxu0
      %v510 = vadd.f32 0.0, %v509
      %v511 = vpop.f32.mrf.mxu0
      %v512 = vadd.f32 0.0, %v511
      %513 = vmatmul.bf16.gmra.mxu0 %v478
      %v514 = vpop.f32.mrf.mxu0
      %v515 = vadd.f32 0.0, %v514
      %v516 = vpop.f32.mrf.mxu0
      %v517 = vadd.f32 0.0, %v516
      %518 = vmatmul.bf16.gmra.mxu0 %v481
      %v519 = vpop.f32.mrf.mxu0
      %v520 = vadd.f32 0.0, %v519
      %v521 = vpop.f32.mrf.mxu0
      %v522 = vadd.f32 0.0, %v521
      %523 = vmatmul.bf16.gmra.mxu0 %v484
      %v524 = vpop.f32.mrf.mxu0
      %v525 = vadd.f32 0.0, %v524
      %v526 = vpop.f32.mrf.mxu0
      %v527 = vadd.f32 0.0, %v526
      %528 = vmatmul.bf16.gmra.mxu0 %v487
      %v529 = vpop.f32.mrf.mxu0
      %v530 = vadd.f32 0.0, %v529
      %v531 = vpop.f32.mrf.mxu0
      %v532 = vadd.f32 0.0, %v531
      %533 = vmatmul.bf16.gmra.mxu0 %v490
      %v534 = vpop.f32.mrf.mxu0
      %v535 = vadd.f32 0.0, %v534
      %v536 = vpop.f32.mrf.mxu0
      %v537 = vadd.f32 0.0, %v536
      %538 = vmatmul.bf16.gmra.mxu0 %v493
      %v539 = vpop.f32.mrf.mxu0
      %v540 = vadd.f32 0.0, %v539
      %v541 = vpop.f32.mrf.mxu0
      %v542 = vadd.f32 0.0, %v541
      %543 = vdwg.mxu0
      %v546 = vunpack.c.l.b16 %v405
      %v547 = vunpack.c.l.b16 %v406
      %v548 = vpack.c.b16 %v547, %v546
      %v551 = vsel %vm249, %v397, 0
      %v554 = vsel %vm249, %v398, 0
      %v557 = vsel %vm249, %v399, 0
      %v560 = vsel %vm249, %v400, 0
      %v563 = vsel %vm249, %v401, 0
      %v566 = vsel %vm249, %v402, 0
      %v569 = vsel %vm249, %v403, 0
      %v572 = vsel %vm249, %v404, 0
      %574 = vmatpush.bf16.msra.mxu0 0
      %575 = vmatpush.bf16.msra.mxu0 0
      %576 = vmatpush.bf16.msra.mxu0 0
      %577 = vmatpush.bf16.msra.mxu0 0
      %578 = vmatpush.bf16.msra.mxu0 0
      %579 = vmatpush.bf16.msra.mxu0 0
      %580 = vmatpush.bf16.msra.mxu0 0
      %581 = vmatpush.bf16.msra.mxu0 %v548
      %582 = vmatmul.bf16.gmra.mxu0 %v551
      %v583 = vpop.f32.mrf.mxu0
      %v584 = vadd.f32 %v505, %v583
      %v585 = vpop.f32.mrf.mxu0
      %v586 = vadd.f32 %v507, %v585
      %587 = vmatmul.bf16.gmra.mxu0 %v554
      %v588 = vpop.f32.mrf.mxu0
      %v589 = vadd.f32 %v510, %v588
      %v590 = vpop.f32.mrf.mxu0
      %v591 = vadd.f32 %v512, %v590
      %592 = vmatmul.bf16.gmra.mxu0 %v557
      %v593 = vpop.f32.mrf.mxu0
      %v594 = vadd.f32 %v515, %v593
      %v595 = vpop.f32.mrf.mxu0
      %v596 = vadd.f32 %v517, %v595
      %597 = vmatmul.bf16.gmra.mxu0 %v560
      %v598 = vpop.f32.mrf.mxu0
      %v599 = vadd.f32 %v520, %v598
      %v600 = vpop.f32.mrf.mxu0
      %v601 = vadd.f32 %v522, %v600
      %602 = vmatmul.bf16.gmra.mxu0 %v563
      %v603 = vpop.f32.mrf.mxu0
      %v604 = vadd.f32 %v525, %v603
      %v605 = vpop.f32.mrf.mxu0
      %v606 = vadd.f32 %v527, %v605
      %607 = vmatmul.bf16.gmra.mxu0 %v566
      %v608 = vpop.f32.mrf.mxu0
      %v609 = vadd.f32 %v530, %v608
      %v610 = vpop.f32.mrf.mxu0
      %v611 = vadd.f32 %v532, %v610
      %612 = vmatmul.bf16.gmra.mxu0 %v569
      %v613 = vpop.f32.mrf.mxu0
      %v614 = vadd.f32 %v535, %v613
      %v615 = vpop.f32.mrf.mxu0
      %v616 = vadd.f32 %v537, %v615
      %617 = vmatmul.bf16.gmra.mxu0 %v572
      %v618 = vpop.f32.mrf.mxu0
      %v619 = vadd.f32 %v540, %v618
      %v620 = vpop.f32.mrf.mxu0
      %v621 = vadd.f32 %v542, %v620
      %622 = vdwg.mxu0
      %v623 = vld [vmem:[%s6] sm:$0x1]
      %v625 = vperm.slane %v623, 0
      %v627 = vadd.f32 %v584, %v625
      %v628 = vadd.f32 %v586, %v625
      %v629 = vadd.f32 %v589, %v625
      %v630 = vadd.f32 %v591, %v625
      %v631 = vadd.f32 %v594, %v625
      %v632 = vadd.f32 %v596, %v625
      %v633 = vadd.f32 %v599, %v625
      %v634 = vadd.f32 %v601, %v625
      %v635 = vadd.f32 %v604, %v625
      %v636 = vadd.f32 %v606, %v625
      %v637 = vadd.f32 %v609, %v625
      %v638 = vadd.f32 %v611, %v625
      %v639 = vadd.f32 %v614, %v625
      %v640 = vadd.f32 %v616, %v625
      %v641 = vadd.f32 %v619, %v625
      %v642 = vadd.f32 %v621, %v625
      %v643 = vmax.f32 %v627, 0.0
      %v644 = vmax.f32 %v628, 0.0
      %v645 = vmax.f32 %v629, 0.0
      %v646 = vmax.f32 %v630, 0.0
      %v647 = vmax.f32 %v631, 0.0
      %v648 = vmax.f32 %v632, 0.0
      %v649 = vmax.f32 %v633, 0.0
      %v650 = vmax.f32 %v634, 0.0
      %v651 = vmax.f32 %v635, 0.0
      %v652 = vmax.f32 %v636, 0.0
      %v653 = vmax.f32 %v637, 0.0
      %v654 = vmax.f32 %v638, 0.0
      %v655 = vmax.f32 %v639, 0.0
      %v656 = vmax.f32 %v640, 0.0
      %v657 = vmax.f32 %v641, 0.0
      %v658 = vmax.f32 %v642, 0.0
      %v659 = vpack.c.bf16 %v644, %v643
      %v660 = vpack.c.bf16 %v646, %v645
      %v661 = vpack.c.bf16 %v648, %v647
      %v662 = vpack.c.bf16 %v650, %v649
      %v663 = vpack.c.bf16 %v652, %v651
      %v664 = vpack.c.bf16 %v654, %v653
      %v665 = vpack.c.bf16 %v656, %v655
      %v666 = vpack.c.bf16 %v658, %v657
      %v667 = vld [vmem:[%s7] sm:$0xff]
      %v668 = vld [vmem:[%s7 + $0x8] sm:$0xff]
      %v669 = vld [vmem:[%s7 + $0x10] sm:$0xff]
      %v670 = vld [vmem:[%s7 + $0x18] sm:$0xff]
      %v675 = vunpack.c.l.b16 %v667
      %v676 = vunpack.c.h.b16 %v667
      %v677 = vunpack.c.l.b16 %v668
      %v678 = vunpack.c.h.b16 %v668
      %v679 = vunpack.c.l.b16 %v669
      %v680 = vunpack.c.h.b16 %v669
      %v681 = vunpack.c.l.b16 %v670
      %v682 = vunpack.c.h.b16 %v670
      %v683 = vpack.c.b16 %v677, %v675
      %v684 = vpack.c.b16 %v678, %v676
      %v685 = vpack.c.b16 %v681, %v679
      %v686 = vpack.c.b16 %v682, %v680
      %vm691 = vcmask 261120
      %v693 = vsel %vm691, %v659, 0
      %v696 = vsel %vm691, %v660, 0
      %v699 = vsel %vm691, %v661, 0
      %v702 = vsel %vm691, %v662, 0
      %v705 = vsel %vm691, %v663, 0
      %v708 = vsel %vm691, %v664, 0
      %v711 = vsel %vm691, %v665, 0
      %v714 = vsel %vm691, %v666, 0
      %716 = vmatpush.bf16.msra.mxu0 0
      %717 = vmatpush.bf16.msra.mxu0 0
      %718 = vmatpush.bf16.msra.mxu0 0
      %719 = vmatpush.bf16.msra.mxu0 0
      %720 = vmatpush.bf16.msra.mxu0 0
      %721 = vmatpush.bf16.msra.mxu0 0
      %722 = vmatpush.bf16.msra.mxu0 %v685
      %723 = vmatpush.bf16.msra.mxu0 %v683
      %724 = vmatmul.bf16.gmra.mxu0 %v693
      %v725 = vpop.f32.mrf.mxu0
      %v726 = vadd.f32 0.0, %v725
      %v727 = vpop.f32.mrf.mxu0
      %v728 = vadd.f32 0.0, %v727
      %729 = vmatmul.bf16.gmra.mxu0 %v696
      %v730 = vpop.f32.mrf.mxu0
      %v731 = vadd.f32 0.0, %v730
      %v732 = vpop.f32.mrf.mxu0
      %v733 = vadd.f32 0.0, %v732
      %734 = vmatmul.bf16.gmra.mxu0 %v699
      %v735 = vpop.f32.mrf.mxu0
      %v736 = vadd.f32 0.0, %v735
      %v737 = vpop.f32.mrf.mxu0
      %v738 = vadd.f32 0.0, %v737
      %739 = vmatmul.bf16.gmra.mxu0 %v702
      %v740 = vpop.f32.mrf.mxu0
      %v741 = vadd.f32 0.0, %v740
      %v742 = vpop.f32.mrf.mxu0
      %v743 = vadd.f32 0.0, %v742
      %744 = vmatmul.bf16.gmra.mxu0 %v705
      %v745 = vpop.f32.mrf.mxu0
      %v746 = vadd.f32 0.0, %v745
      %v747 = vpop.f32.mrf.mxu0
      %v748 = vadd.f32 0.0, %v747
      %749 = vmatmul.bf16.gmra.mxu0 %v708
      %v750 = vpop.f32.mrf.mxu0
      %v751 = vadd.f32 0.0, %v750
      %v752 = vpop.f32.mrf.mxu0
      %v753 = vadd.f32 0.0, %v752
      %754 = vmatmul.bf16.gmra.mxu0 %v711
      %v755 = vpop.f32.mrf.mxu0
      %v756 = vadd.f32 0.0, %v755
      %v757 = vpop.f32.mrf.mxu0
      %v758 = vadd.f32 0.0, %v757
      %759 = vmatmul.bf16.gmra.mxu0 %v714
      %v760 = vpop.f32.mrf.mxu0
      %v761 = vadd.f32 0.0, %v760
      %v762 = vpop.f32.mrf.mxu0
      %v763 = vadd.f32 0.0, %v762
      %764 = vdwg.mxu0
      %765 = vmatpush.bf16.msra.mxu0 0
      %766 = vmatpush.bf16.msra.mxu0 0
      %767 = vmatpush.bf16.msra.mxu0 0
      %768 = vmatpush.bf16.msra.mxu0 0
      %769 = vmatpush.bf16.msra.mxu0 0
      %770 = vmatpush.bf16.msra.mxu0 0
      %771 = vmatpush.bf16.msra.mxu0 %v686
      %772 = vmatpush.bf16.msra.mxu0 %v684
      %773 = vmatmul.bf16.gmra.mxu0 %v693
      %v774 = vpop.f32.mrf.mxu0
      %v775 = vadd.f32 0.0, %v774
      %v776 = vpop.f32.mrf.mxu0
      %v777 = vadd.f32 0.0, %v776
      %778 = vmatmul.bf16.gmra.mxu0 %v696
      %v779 = vpop.f32.mrf.mxu0
      %v780 = vadd.f32 0.0, %v779
      %v781 = vpop.f32.mrf.mxu0
      %v782 = vadd.f32 0.0, %v781
      %783 = vmatmul.bf16.gmra.mxu0 %v699
      %v784 = vpop.f32.mrf.mxu0
      %v785 = vadd.f32 0.0, %v784
      %v786 = vpop.f32.mrf.mxu0
      %v787 = vadd.f32 0.0, %v786
      %788 = vmatmul.bf16.gmra.mxu0 %v702
      %v789 = vpop.f32.mrf.mxu0
      %v790 = vadd.f32 0.0, %v789
      %v791 = vpop.f32.mrf.mxu0
      %v792 = vadd.f32 0.0, %v791
      %793 = vmatmul.bf16.gmra.mxu0 %v705
      %v794 = vpop.f32.mrf.mxu0
      %v795 = vadd.f32 0.0, %v794
      %v796 = vpop.f32.mrf.mxu0
      %v797 = vadd.f32 0.0, %v796
      %798 = vmatmul.bf16.gmra.mxu0 %v708
      %v799 = vpop.f32.mrf.mxu0
      %v800 = vadd.f32 0.0, %v799
      %v801 = vpop.f32.mrf.mxu0
      %v802 = vadd.f32 0.0, %v801
      %803 = vmatmul.bf16.gmra.mxu0 %v711
      %v804 = vpop.f32.mrf.mxu0
      %v805 = vadd.f32 0.0, %v804
      %v806 = vpop.f32.mrf.mxu0
      %v807 = vadd.f32 0.0, %v806
      %808 = vmatmul.bf16.gmra.mxu0 %v714
      %v809 = vpop.f32.mrf.mxu0
      %v810 = vadd.f32 0.0, %v809
      %v811 = vpop.f32.mrf.mxu0
      %v812 = vadd.f32 0.0, %v811
      %813 = vdwg.mxu0
      %v814 = vpack.c.bf16 %v726, %v726
      %v815 = vpack.c.bf16 %v728, %v728
      %v816 = vpack.c.bf16 %v731, %v731
      %v817 = vpack.c.bf16 %v733, %v733
      %v818 = vpack.c.bf16 %v736, %v736
      %v819 = vpack.c.bf16 %v738, %v738
      %v820 = vpack.c.bf16 %v741, %v741
      %v821 = vpack.c.bf16 %v743, %v743
      %v822 = vpack.c.bf16 %v746, %v746
      %v823 = vpack.c.bf16 %v748, %v748
      %v824 = vpack.c.bf16 %v751, %v751
      %v825 = vpack.c.bf16 %v753, %v753
      %v826 = vpack.c.bf16 %v756, %v756
      %v827 = vpack.c.bf16 %v758, %v758
      %v828 = vpack.c.bf16 %v761, %v761
      %v829 = vpack.c.bf16 %v763, %v763
      %830 = vst [vmem:[#allocation3] sm:$0xf] %v814
      %831 = vst [vmem:[#allocation3 + $0x4] sm:$0xf] %v815
      %832 = vst [vmem:[#allocation3 + $0x8] sm:$0xf] %v816
      %833 = vst [vmem:[#allocation3 + $0xc] sm:$0xf] %v817
      %834 = vst [vmem:[#allocation3 + $0x10] sm:$0xf] %v818
      %835 = vst [vmem:[#allocation3 + $0x14] sm:$0xf] %v819
      %836 = vst [vmem:[#allocation3 + $0x18] sm:$0xf] %v820
      %837 = vst [vmem:[#allocation3 + $0x1c] sm:$0xf] %v821
      %838 = vst [vmem:[#allocation3 + $0x20] sm:$0xf] %v822
      %839 = vst [vmem:[#allocation3 + $0x24] sm:$0xf] %v823
      %840 = vst [vmem:[#allocation3 + $0x28] sm:$0xf] %v824
      %841 = vst [vmem:[#allocation3 + $0x2c] sm:$0xf] %v825
      %842 = vst [vmem:[#allocation3 + $0x30] sm:$0xf] %v826
      %843 = vst [vmem:[#allocation3 + $0x34] sm:$0xf] %v827
      %844 = vst [vmem:[#allocation3 + $0x38] sm:$0xf] %v828
      %845 = vst [vmem:[#allocation3 + $0x3c] sm:$0xf] %v829
      %v846 = vpack.c.bf16 %v775, %v775
      %v847 = vpack.c.bf16 %v777, %v777
      %v848 = vpack.c.bf16 %v780, %v780
      %v849 = vpack.c.bf16 %v782, %v782
      %v850 = vpack.c.bf16 %v785, %v785
      %v851 = vpack.c.bf16 %v787, %v787
      %v852 = vpack.c.bf16 %v790, %v790
      %v853 = vpack.c.bf16 %v792, %v792
      %v854 = vpack.c.bf16 %v795, %v795
      %v855 = vpack.c.bf16 %v797, %v797
      %v856 = vpack.c.bf16 %v800, %v800
      %v857 = vpack.c.bf16 %v802, %v802
      %v858 = vpack.c.bf16 %v805, %v805
      %v859 = vpack.c.bf16 %v807, %v807
      %v860 = vpack.c.bf16 %v810, %v810
      %v861 = vpack.c.bf16 %v812, %v812
      %862 = vst [vmem:[#allocation5] sm:$0xf] %v846
      %863 = vst [vmem:[#allocation5 + $0x4] sm:$0xf] %v847
      %864 = vst [vmem:[#allocation5 + $0x8] sm:$0xf] %v848
      %865 = vst [vmem:[#allocation5 + $0xc] sm:$0xf] %v849
      %866 = vst [vmem:[#allocation5 + $0x10] sm:$0xf] %v850
      %867 = vst [vmem:[#allocation5 + $0x14] sm:$0xf] %v851
      %868 = vst [vmem:[#allocation5 + $0x18] sm:$0xf] %v852
      %869 = vst [vmem:[#allocation5 + $0x1c] sm:$0xf] %v853
      %870 = vst [vmem:[#allocation5 + $0x20] sm:$0xf] %v854
      %871 = vst [vmem:[#allocation5 + $0x24] sm:$0xf] %v855
      %872 = vst [vmem:[#allocation5 + $0x28] sm:$0xf] %v856
      %873 = vst [vmem:[#allocation5 + $0x2c] sm:$0xf] %v857
      %874 = vst [vmem:[#allocation5 + $0x30] sm:$0xf] %v858
      %875 = vst [vmem:[#allocation5 + $0x34] sm:$0xf] %v859
      %876 = vst [vmem:[#allocation5 + $0x38] sm:$0xf] %v860
      %877 = vst [vmem:[#allocation5 + $0x3c] sm:$0xf] %v861
    $region41: #{tpu_custom_call.1} parent=1 // pred_fallthru
      _
    // Predicated region
    $region42: #{tpu_custom_call.1} parent=1 // pred_check
      _
    $region43: #{tpu_custom_call.1} parent=1 // pred_check_branch
      %879 = sbr.rel (0) target = $region45
    $region44: #{tpu_custom_call.1} parent=1 // pred_region
      %881 = vsyncadd [#allocation4], 0
      %s882 = sshll.u32 [#allocation3], 4
      %s883 = int_to_ptr.vmem [resolvable:$true] %s882
      %s884 = sshll.u32 %s8, 4
      %s885 = int_to_ptr.hbm [resolvable:$true] %s884
      %890 = dma.vmem_to_hbm [thread:$0]  %s883, 1024, %s885, [#allocation4], 64, 64, 4
    $region45: #{tpu_custom_call.1} parent=1 // pred_fallthru
      _
    // Predicated region
    $region46: #{tpu_custom_call.1} parent=1 // pred_check
      _
    $region47: #{tpu_custom_call.1} parent=1 // pred_check_branch
      %892 = sbr.rel (0) target = $region49
    $region48: #{tpu_custom_call.1} parent=1 // pred_region
      %894 = vsyncadd [#allocation6], 0
      %s895 = sshll.u32 [#allocation5], 4
      %s896 = int_to_ptr.vmem [resolvable:$true] %s895
      %s897 = sshll.u32 %s9, 4
      %s898 = int_to_ptr.hbm [resolvable:$true] %s897
      %903 = dma.vmem_to_hbm [thread:$0]  %s896, 1024, %s898, [#allocation6], 64, 64, 4
    $region49: #{tpu_custom_call.1} parent=1 // pred_fallthru
      _
    // Predicated region
    $region50: #{tpu_custom_call.1} parent=1 // pred_check
      _
    $region51: #{tpu_custom_call.1} parent=1 // pred_check_branch
      %905 = sbr.rel (0) target = $region53
    $region52: #{tpu_custom_call.1} parent=1 // pred_region
      %907 = dma.done [#allocation4], 1024
    $region53: #{tpu_custom_call.1} parent=1 // pred_fallthru
      _
    // Predicated region
    $region54: #{tpu_custom_call.1} parent=1 // pred_check
      _
    $region55: #{tpu_custom_call.1} parent=1 // pred_check_branch
      %909 = sbr.rel (0) target = $region57
    $region56: #{tpu_custom_call.1} parent=1 // pred_region
      %911 = dma.done [#allocation6], 1024
    $region57: #{tpu_custom_call.1} parent=1 // pred_fallthru
      _
    %912 = vsyncpa [#allocation4], 1
    %913 = vsyncpa [#allocation6], 1

</llo_original>
